<compile_context>
chip_gen: v7x
topology: tpu7x:2x2x1
jax: 0.10.0
libtpu: 0.0.40
codegen_flags: <defaults>
</compile_context>

<pallas_src>
import jax
import jax.numpy as jnp
from jax import lax
from jax.experimental import pallas as pl
from jax.experimental.pallas import tpu as pltpu

# ---------------- synthetic config (small shapes, consistent with the module) ----------------
B, C, H, W = 2, 4, 16, 16          # input images, NCHW (like PyTorch)
PS = 4                             # encoder: non-overlapping 4x4 patch conv (stride 4)
HP, WP = H // PS, W // PS          # latent spatial grid 4x4
S = HP * WP                        # tokens per image ("seq_length") = 16
N = B * S                          # flattened token count = 32
PDIM = C * PS * PS                 # patch feature dim = 64
D = 16                             # codebook embedding dim
K = 32                             # codebook size (num_codebook_vectors)
HID = 64                           # simplified denoiser hidden dim ("unet_dim" stand-in)
T = 10                             # diffusion_steps

# lane-padded (128-wide) feature dims -- padding is mathematically exact (see wrapper)
LANE = 128
PDIM_P, D_P, K_P, HID_P = LANE, LANE, LANE, LANE


# ---------------- fused kernel: encode + VQ + q_sample + denoiser + per-tile SSE ----------------
def vq_diffusion_fused_kernel(
        # scalar-prefetch (SMEM) refs
        t_ref, sab_ref, somab_ref,
        # VMEM inputs
        patches_ref, wenc_ref, vq_ref, noise_ref, temb_ref, w1_ref, w2_ref,
        # VMEM output (per-tile SSE partial, lane-dense)
        sse_ref):
    f32 = jnp.float32
    i = pl.program_id(0)

    # per-tile diffusion scalars (whole tile = one image = one timestep)
    tb = t_ref[i]                       # int32 from SMEM
    sa = sab_ref[tb]                    # sqrt(alpha_bar[t])
    sb = somab_ref[tb]                  # sqrt(1 - alpha_bar[t])

    # ---- VQVAE encoder (f32 MXU): patch-conv as matmul; benc folded via constant-1 column ----
    z = jnp.dot(patches_ref[...], wenc_ref[...], preferred_element_type=f32)   # (S, D_P), z[:,D]==1

    # ---- vector quantization: dist = ||e||^2 - 2 z.e  (same argmin as ||z-e||^2), one matmul ----
    dist = jnp.dot(z, vq_ref[...], preferred_element_type=f32)                 # (S, K_P)
    lane_k = lax.broadcasted_iota(jnp.int32, (S, K_P), 1)
    dist = jnp.where(lane_k < K, dist, jnp.inf)                                # mask padded codes

    # single cross-lane reduce; one-hot by equality with the row minimum
    # (matches torch.argmin except on exact float ties, which have measure zero here)
    min_d = jnp.min(dist, axis=-1, keepdims=True)
    x0 = 2.0 * (dist == min_d).astype(f32) - 1.0                               # (S, K_P) in [-1, 1]

    # ---- q_sample: x_t = sqrt(abar) x0 + sqrt(1-abar) eps ----
    xt = sa * x0 + sb * noise_ref[...]                                         # (S, K_P)

    # ---- simplified denoiser ("unet"): 2-layer MLP, bf16 weights, f32 accumulation ----
    # b1 folded into the time-embedding row; b2 carried by the constant-1 hidden column.
    temb = temb_ref[pl.ds(tb, 1), :]                                           # (1, HID_P) gather
    h = jnp.maximum(
        jnp.dot(xt.astype(jnp.bfloat16), w1_ref[...], preferred_element_type=f32) + temb,
        0.0)                                                                   # (S, HID_P)
    pred = jnp.dot(h.astype(jnp.bfloat16), w2_ref[...], preferred_element_type=f32)  # (S, K_P)

    # ---- eps-prediction squared error (padded columns contribute exactly 0) ----
    diff = pred - noise_ref[...]
    sse_ref[...] = jnp.broadcast_to(jnp.sum(diff * diff), sse_ref.shape)


# ---------------- wrapper ----------------
def vq_diffusion_forward(x, params):
    f32 = jnp.float32

    # glue: NCHW -> non-overlapping 4x4 patches, flattened batch-major to (N, PDIM)
    xp = x.reshape(B, C, HP, PS, WP, PS)
    xp = jnp.transpose(xp, (0, 2, 4, 1, 3, 5)).reshape(N, PDIM)

    # ---- encoder / VQ operands (kept f32: index selection is precision-critical) ----
    # constant-1 column at PDIM carries benc through the encoder matmul
    patches = jnp.zeros((N, PDIM_P), f32).at[:, :PDIM].set(xp).at[:, PDIM].set(1.0)
    wenc = jnp.zeros((PDIM_P, D_P), f32)
    wenc = wenc.at[:PDIM, :D].set(params['wenc'])
    wenc = wenc.at[PDIM, :D].set(params['benc'][0])
    wenc = wenc.at[PDIM, D].set(1.0)                     # z[:, D] == 1 -> carries ||e||^2 row below

    cb = params['codebook']                              # (K, D)
    vq_mat = jnp.zeros((D_P, K_P), f32)
    vq_mat = vq_mat.at[:D, :K].set(-2.0 * cb.T)          # -2 e^T
    vq_mat = vq_mat.at[D, :K].set(jnp.sum(cb * cb, -1))  # ||e||^2 (picked up by z[:,D]==1)

    noise = jnp.zeros((N, K_P), f32).at[:, :K].set(params['noise'])

    # ---- denoiser operands: bf16 weights (half the DMA/VMEM), biases folded ----
    w1 = jnp.zeros((K_P, HID_P), f32).at[:K, :HID].set(params['w1']).astype(jnp.bfloat16)
    w2 = jnp.zeros((HID_P, K_P), f32).at[:HID, :K].set(params['w2'])
    w2 = w2.at[HID, :K].set(params['b2'][0]).astype(jnp.bfloat16)       # b2 via const-1 hidden col
    temb_tab = jnp.zeros((T, HID_P), f32).at[:, :HID].set(params['temb_table'] + params['b1'])
    temb_tab = temb_tab.at[:, HID].set(1.0)              # constant-1 hidden column (f32: tiny table,
                                                         # avoids packed-dtype dynamic-row gather)

    # glue: diffusion schedule tables ride into SMEM via scalar prefetch
    betas = jnp.linspace(1e-4, 2e-2, T, dtype=f32)
    alpha_bar = jnp.cumprod(1.0 - betas)
    sqrt_ab = jnp.sqrt(alpha_bar).astype(f32)            # (T,)
    sqrt_omab = jnp.sqrt(1.0 - alpha_bar).astype(f32)    # (T,)
    t = params['t'].astype(jnp.int32)                    # (B,)

    rowblk = lambda shape: pl.BlockSpec(shape, lambda i, *_: (i, 0))        # per-tile activations
    resident = lambda shape: pl.BlockSpec(shape, lambda i, *_: (0,) * len(shape))  # resident weights

    partials = pl.pallas_call(
        vq_diffusion_fused_kernel,
        grid_spec=pltpu.PrefetchScalarGridSpec(
            num_scalar_prefetch=3,                       # t, sqrt(abar), sqrt(1-abar) -> SMEM
            grid=(B,),                                   # one image's S tokens per step
            in_specs=[
                rowblk((S, PDIM_P)),                     # patches tile (+ const-1 col)
                resident((PDIM_P, D_P)),                 # wenc (benc row, const-1 col)  f32
                resident((D_P, K_P)),                    # VQ distance matrix            f32
                rowblk((S, K_P)),                        # noise tile                    f32
                resident((T, HID_P)),                    # time-emb table (b1, const-1)  f32
                resident((K_P, HID_P)),                  # w1                            bf16
                resident((HID_P, K_P)),                  # w2 (b2 row)                   bf16
            ],
            out_specs=pl.BlockSpec((1, 8, 128), lambda i, *_: (i, 0, 0)),
        ),
        out_shape=jax.ShapeDtypeStruct((B, 8, 128), jnp.float32),
        # per-tile partial outputs are disjoint blocks -> "parallel" is safe on v7x megacore
        compiler_params=pltpu.CompilerParams(dimension_semantics=("parallel",)),
    )(t, sqrt_ab, sqrt_omab, patches, wenc, vq_mat, noise, temb_tab, w1, w2)

    # reduce per-tile SSE partials in JAX; mean like F.mse_loss(pred, noise)
    return jnp.sum(partials[:, 0, 0]) / float(N * K)


# ---------------- pure-JAX reference (f32, unpadded) ----------------
def vq_diffusion_reference(x, params):
    xp = x.reshape(B, C, HP, PS, WP, PS)
    xp = jnp.transpose(xp, (0, 2, 4, 1, 3, 5)).reshape(N, PDIM)
    z = xp @ params['wenc'] + params['benc']
    e = params['codebook']
    dist = (jnp.sum(z * z, -1, keepdims=True) - 2.0 * z @ e.T + jnp.sum(e * e, -1)[None, :])
    idx = jnp.argmin(dist, axis=-1)
    x0 = 2.0 * jax.nn.one_hot(idx, K, dtype=jnp.float32) - 1.0
    betas = jnp.linspace(1e-4, 2e-2, T, dtype=jnp.float32)
    alpha_bar = jnp.cumprod(1.0 - betas)
    t = params['t']
    sa = jnp.repeat(jnp.sqrt(alpha_bar[t]), S)[:, None]
    sb = jnp.repeat(jnp.sqrt(1.0 - alpha_bar[t]), S)[:, None]
    xt = sa * x0 + sb * params['noise']
    temb = jnp.repeat(params['temb_table'][t], S, axis=0)
    h = jnp.maximum(xt @ params['w1'] + params['b1'] + temb, 0.0)
    pred = h @ params['w2'] + params['b2']
    return jnp.mean((pred - params['noise']) ** 2)


def init_params(key):
    ks = jax.random.split(key, 10)
    return {
        'wenc': jax.random.normal(ks[0], (PDIM, D), jnp.float32) * 0.1,
        'benc': jax.random.normal(ks[1], (1, D), jnp.float32) * 0.01,
        'codebook': jax.random.normal(ks[2], (K, D), jnp.float32),
        'w1': jax.random.normal(ks[3], (K, HID), jnp.float32) * 0.1,
        'b1': jax.random.normal(ks[4], (1, HID), jnp.float32) * 0.01,
        'w2': jax.random.normal(ks[5], (HID, K), jnp.float32) * 0.1,
        'b2': jax.random.normal(ks[6], (1, K), jnp.float32) * 0.01,
        'temb_table': jax.random.normal(ks[7], (T, HID), jnp.float32) * 0.1,
        'noise': jax.random.normal(ks[8], (N, K), jnp.float32),
        't': jax.random.randint(ks[9], (B,), 0, T, jnp.int32),
    }


if __name__ == "__main__":
    key = jax.random.PRNGKey(0)
    kx, kp = jax.random.split(key)
    x = jax.random.normal(kx, (B, C, H, W), jnp.float32)      # NCHW, like PyTorch
    params = init_params(kp)

    loss = jax.jit(vq_diffusion_forward)(x, params)
    loss = jax.block_until_ready(loss)
    assert loss.shape == () and bool(jnp.isfinite(loss))

    # pure-JAX reference check (kernel uses bf16 denoiser weights -> loose tolerance)
    loss_ref = jax.block_until_ready(vq_diffusion_reference(x, params))
    rel = abs(float(loss) - float(loss_ref)) / max(abs(float(loss_ref)), 1e-6)
    assert rel < 5e-2, f"kernel loss {float(loss)} vs reference {float(loss_ref)} (rel {rel})"

    print("KERNEL_OK")
</pallas_src>

<mosaic_0001>
module attributes {stable_mosaic.version = 11 : i64} {
  func.func @vq_diffusion_fused_kernel(%arg0: i32, %arg1: memref<2xi32, #tpu.memory_space<smem>>, %arg2: memref<10xf32, #tpu.memory_space<smem>>, %arg3: memref<10xf32, #tpu.memory_space<smem>>, %arg4: memref<16x128xf32, #tpu.memory_space<vmem>>, %arg5: memref<128x128xf32, #tpu.memory_space<vmem>>, %arg6: memref<128x128xf32, #tpu.memory_space<vmem>>, %arg7: memref<16x128xf32, #tpu.memory_space<vmem>>, %arg8: memref<10x128xf32, #tpu.memory_space<vmem>>, %arg9: memref<128x128xbf16, #tpu.memory_space<vmem>>, %arg10: memref<128x128xbf16, #tpu.memory_space<vmem>>, %arg11: memref<1x8x128xf32, #tpu.memory_space<vmem>>) attributes {dimension_semantics = [#tpu.dimension_semantics<parallel>], iteration_bounds = array<i64: 2>, scalar_prefetch = 3 : i64, scratch_operands = 0 : i64, tpu.core_type = #tpu.core_type<tc>, window_params = [{transform_indices = @transform_0, window_bounds = array<i64: 16, 128>}, {pipeline_mode = #tpu.pipeline_mode<synchronous>, transform_indices = @transform_1, window_bounds = array<i64: 128, 128>}, {pipeline_mode = #tpu.pipeline_mode<synchronous>, transform_indices = @transform_2, window_bounds = array<i64: 128, 128>}, {transform_indices = @transform_3, window_bounds = array<i64: 16, 128>}, {pipeline_mode = #tpu.pipeline_mode<synchronous>, transform_indices = @transform_4, window_bounds = array<i64: 10, 128>}, {pipeline_mode = #tpu.pipeline_mode<synchronous>, transform_indices = @transform_5, window_bounds = array<i64: 128, 128>}, {pipeline_mode = #tpu.pipeline_mode<synchronous>, transform_indices = @transform_6, window_bounds = array<i64: 128, 128>}, {transform_indices = @transform_7, window_bounds = array<i64: 1, 8, 128>}]} {
    %0 = arith.index_cast %arg0 : i32 to index
    %1 = memref.load %arg1[%0] : memref<2xi32, #tpu.memory_space<smem>>
    %2 = arith.index_cast %1 : i32 to index
    %3 = memref.load %arg2[%2] : memref<10xf32, #tpu.memory_space<smem>>
    %4 = arith.index_cast %1 : i32 to index
    %5 = memref.load %arg3[%4] : memref<10xf32, #tpu.memory_space<smem>>
    %c0 = arith.constant 0 : index
    %c0_0 = arith.constant 0 : index
    %6 = vector.load %arg4[%c0, %c0_0] : memref<16x128xf32, #tpu.memory_space<vmem>>, vector<16x128xf32>
    %c0_1 = arith.constant 0 : index
    %c0_2 = arith.constant 0 : index
    %7 = vector.load %arg5[%c0_1, %c0_2] : memref<128x128xf32, #tpu.memory_space<vmem>>, vector<128x128xf32>
    %cst = arith.constant dense<0.000000e+00> : vector<16x128xf32>
    %8 = tpu.matmul %6, %7, %cst {dimension_numbers = #tpu.dot_dimension_numbers<[1], [0], [0], [1], [0, 0, 1, 1], [], []>} : vector<16x128xf32>, vector<128x128xf32>, vector<16x128xf32> -> vector<16x128xf32>
    %c0_3 = arith.constant 0 : index
    %c0_4 = arith.constant 0 : index
    %9 = vector.load %arg6[%c0_3, %c0_4] : memref<128x128xf32, #tpu.memory_space<vmem>>, vector<128x128xf32>
    %cst_5 = arith.constant dense<0.000000e+00> : vector<16x128xf32>
    %10 = tpu.matmul %8, %9, %cst_5 {dimension_numbers = #tpu.dot_dimension_numbers<[1], [0], [0], [1], [0, 0, 1, 1], [], []>} : vector<16x128xf32>, vector<128x128xf32>, vector<16x128xf32> -> vector<16x128xf32>
    %11 = tpu.iota {dimensions = array<i32: 1>} : vector<16x128xi32>
    %c32_i32 = arith.constant 32 : i32
    %12 = vector.broadcast %c32_i32 : i32 to vector<16x128xi32>
    %13 = arith.cmpi slt, %11, %12 : vector<16x128xi32>
    %cst_6 = arith.constant 0x7F800000 : f32
    %14 = vector.broadcast %cst_6 : f32 to vector<16x128xf32>
    %15 = arith.select %13, %10, %14 : vector<16x128xi1>, vector<16x128xf32>
    %cst_7 = arith.constant dense<0x7F800000> : vector<16xf32>
    %16 = vector.multi_reduction <minimumf>, %15, %cst_7 [1] : vector<16x128xf32> to vector<16xf32>
    %17 = vector.shape_cast %16 : vector<16xf32> to vector<16x1xf32>
    %18 = vector.broadcast %17 : vector<16x1xf32> to vector<16x128xf32>
    %19 = arith.cmpf oeq, %15, %18 : vector<16x128xf32>
    %20 = arith.extui %19 : vector<16x128xi1> to vector<16x128xi32>
    %21 = arith.sitofp %20 : vector<16x128xi32> to vector<16x128xf32>
    %cst_8 = arith.constant 2.000000e+00 : f32
    %22 = vector.broadcast %cst_8 : f32 to vector<16x128xf32>
    %23 = arith.mulf %22, %21 : vector<16x128xf32>
    %cst_9 = arith.constant 1.000000e+00 : f32
    %24 = vector.broadcast %cst_9 : f32 to vector<16x128xf32>
    %25 = arith.subf %23, %24 : vector<16x128xf32>
    %26 = vector.broadcast %3 : f32 to vector<16x128xf32>
    %27 = arith.mulf %26, %25 : vector<16x128xf32>
    %c0_10 = arith.constant 0 : index
    %c0_11 = arith.constant 0 : index
    %28 = vector.load %arg7[%c0_10, %c0_11] : memref<16x128xf32, #tpu.memory_space<vmem>>, vector<16x128xf32>
    %29 = vector.broadcast %5 : f32 to vector<16x128xf32>
    %30 = arith.mulf %29, %28 : vector<16x128xf32>
    %31 = arith.addf %27, %30 : vector<16x128xf32>
    %32 = arith.index_cast %1 : i32 to index
    %c0_12 = arith.constant 0 : index
    %33 = vector.load %arg8[%32, %c0_12] : memref<10x128xf32, #tpu.memory_space<vmem>>, vector<1x128xf32>
    %34 = arith.truncf %31 : vector<16x128xf32> to vector<16x128xbf16>
    %c0_13 = arith.constant 0 : index
    %c0_14 = arith.constant 0 : index
    %35 = vector.load %arg9[%c0_13, %c0_14] : memref<128x128xbf16, #tpu.memory_space<vmem>>, vector<128x128xbf16>
    %cst_15 = arith.constant dense<0.000000e+00> : vector<16x128xf32>
    %36 = tpu.matmul %34, %35, %cst_15 {dimension_numbers = #tpu.dot_dimension_numbers<[1], [0], [0], [1], [0, 0, 1, 1], [], []>} : vector<16x128xbf16>, vector<128x128xbf16>, vector<16x128xf32> -> vector<16x128xf32>
    %37 = vector.broadcast %33 : vector<1x128xf32> to vector<16x128xf32>
    %38 = arith.addf %36, %37 : vector<16x128xf32>
    %cst_16 = arith.constant 0.000000e+00 : f32
    %39 = vector.broadcast %cst_16 : f32 to vector<16x128xf32>
    %40 = arith.maximumf %38, %39 : vector<16x128xf32>
    %41 = arith.truncf %40 : vector<16x128xf32> to vector<16x128xbf16>
    %c0_17 = arith.constant 0 : index
    %c0_18 = arith.constant 0 : index
    %42 = vector.load %arg10[%c0_17, %c0_18] : memref<128x128xbf16, #tpu.memory_space<vmem>>, vector<128x128xbf16>
    %cst_19 = arith.constant dense<0.000000e+00> : vector<16x128xf32>
    %43 = tpu.matmul %41, %42, %cst_19 {dimension_numbers = #tpu.dot_dimension_numbers<[1], [0], [0], [1], [0, 0, 1, 1], [], []>} : vector<16x128xbf16>, vector<128x128xbf16>, vector<16x128xf32> -> vector<16x128xf32>
    %c0_20 = arith.constant 0 : index
    %c0_21 = arith.constant 0 : index
    %44 = vector.load %arg7[%c0_20, %c0_21] : memref<16x128xf32, #tpu.memory_space<vmem>>, vector<16x128xf32>
    %45 = arith.subf %43, %44 : vector<16x128xf32>
    %46 = arith.mulf %45, %45 : vector<16x128xf32>
    %47 = vector.shape_cast %46 : vector<16x128xf32> to vector<1x16x128xf32>
    %cst_22 = arith.constant dense<0.000000e+00> : vector<1xf32>
    %48 = vector.multi_reduction <add>, %47, %cst_22 [1, 2] : vector<1x16x128xf32> to vector<1xf32>
    %49 = vector.shape_cast %48 : vector<1xf32> to vector<1x1x1xf32>
    %50 = vector.extract %49[0, 0, 0] : f32 from vector<1x1x1xf32>
    %51 = vector.broadcast %50 : f32 to vector<1x8x128xf32>
    %c0_23 = arith.constant 0 : index
    %c0_24 = arith.constant 0 : index
    %c0_25 = arith.constant 0 : index
    %52 = vector.load %arg11[%c0_23, %c0_24, %c0_25] : memref<1x8x128xf32, #tpu.memory_space<vmem>>, vector<1x8x128xf32>
    tpu.vector_store %arg11[%c0_23, %c0_24, %c0_25], %51 {strides = array<i32>} : memref<1x8x128xf32, #tpu.memory_space<vmem>>, vector<1x8x128xf32>,
    return
  }
  func.func @transform_0(%arg0: i32, %arg1: memref<2xi32, #tpu.memory_space<smem>>, %arg2: memref<10xf32, #tpu.memory_space<smem>>, %arg3: memref<10xf32, #tpu.memory_space<smem>>) -> (i32, i32) {
    %c0_i32 = arith.constant 0 : i32
    %c0_i32_0 = arith.constant 0 : i32
    return %arg0, %c0_i32 : i32, i32
  }
  func.func @transform_1(%arg0: i32, %arg1: memref<2xi32, #tpu.memory_space<smem>>, %arg2: memref<10xf32, #tpu.memory_space<smem>>, %arg3: memref<10xf32, #tpu.memory_space<smem>>) -> (i32, i32) {
    %c0_i32 = arith.constant 0 : i32
    %c0_i32_0 = arith.constant 0 : i32
    %c0_i32_1 = arith.constant 0 : i32
    return %c0_i32, %c0_i32_0 : i32, i32
  }
  func.func @transform_2(%arg0: i32, %arg1: memref<2xi32, #tpu.memory_space<smem>>, %arg2: memref<10xf32, #tpu.memory_space<smem>>, %arg3: memref<10xf32, #tpu.memory_space<smem>>) -> (i32, i32) {
    %c0_i32 = arith.constant 0 : i32
    %c0_i32_0 = arith.constant 0 : i32
    %c0_i32_1 = arith.constant 0 : i32
    return %c0_i32, %c0_i32_0 : i32, i32
  }
  func.func @transform_3(%arg0: i32, %arg1: memref<2xi32, #tpu.memory_space<smem>>, %arg2: memref<10xf32, #tpu.memory_space<smem>>, %arg3: memref<10xf32, #tpu.memory_space<smem>>) -> (i32, i32) {
    %c0_i32 = arith.constant 0 : i32
    %c0_i32_0 = arith.constant 0 : i32
    return %arg0, %c0_i32 : i32, i32
  }
  func.func @transform_4(%arg0: i32, %arg1: memref<2xi32, #tpu.memory_space<smem>>, %arg2: memref<10xf32, #tpu.memory_space<smem>>, %arg3: memref<10xf32, #tpu.memory_space<smem>>) -> (i32, i32) {
    %c0_i32 = arith.constant 0 : i32
    %c0_i32_0 = arith.constant 0 : i32
    %c0_i32_1 = arith.constant 0 : i32
    return %c0_i32, %c0_i32_0 : i32, i32
  }
  func.func @transform_5(%arg0: i32, %arg1: memref<2xi32, #tpu.memory_space<smem>>, %arg2: memref<10xf32, #tpu.memory_space<smem>>, %arg3: memref<10xf32, #tpu.memory_space<smem>>) -> (i32, i32) {
    %c0_i32 = arith.constant 0 : i32
    %c0_i32_0 = arith.constant 0 : i32
    %c0_i32_1 = arith.constant 0 : i32
    return %c0_i32, %c0_i32_0 : i32, i32
  }
  func.func @transform_6(%arg0: i32, %arg1: memref<2xi32, #tpu.memory_space<smem>>, %arg2: memref<10xf32, #tpu.memory_space<smem>>, %arg3: memref<10xf32, #tpu.memory_space<smem>>) -> (i32, i32) {
    %c0_i32 = arith.constant 0 : i32
    %c0_i32_0 = arith.constant 0 : i32
    %c0_i32_1 = arith.constant 0 : i32
    return %c0_i32, %c0_i32_0 : i32, i32
  }
  func.func @transform_7(%arg0: i32, %arg1: memref<2xi32, #tpu.memory_space<smem>>, %arg2: memref<10xf32, #tpu.memory_space<smem>>, %arg3: memref<10xf32, #tpu.memory_space<smem>>) -> (i32, i32, i32) {
    %c0_i32 = arith.constant 0 : i32
    %c0_i32_0 = arith.constant 0 : i32
    %c0_i32_1 = arith.constant 0 : i32
    return %arg0, %c0_i32, %c0_i32_0 : i32, i32, i32
  }
}

</mosaic_0001>

<llo_original>
// kernel: vq_diffusion_forward.1
$region0: #{vq_diffusion_forward.1}
  #allocation0 [shape = 'u32[]', space=smem, size = 0x4, offset = 0x4, fixed_abs, tag = 'smem constant byte address 0x4 - core index']
  #allocation1 [shape = 'u32[144,128]{1,0:T(1,128)}', space=vmem, size = 0x12000, scoped, tag = 'internal scratch']
  #allocation2 [shape = 's32[1]{0}', space=sflag, size = 0x4, scoped, tag = 'scoped memory for vq_diffusion_forward.1']
  #allocation3 [shape = 'u8[512]{0}', space=smem, size = 0x200, scoped, tag = 'prefetched SMEM operand 0']
  #allocation4 [shape = 'u8[512]{0}', space=smem, size = 0x200, scoped, tag = 'prefetched SMEM operand 1']
  #allocation5 [shape = 'u8[512]{0}', space=smem, size = 0x200, scoped, tag = 'prefetched SMEM operand 2']
  %s0 = inlined_call_operand.vmem [shape: s32[2], index: 0, kind: input, shape index: {}]
  %s1 = inlined_call_operand.vmem [shape: f32[10], index: 1, kind: input, shape index: {}]
  %s2 = inlined_call_operand.vmem [shape: f32[10], index: 2, kind: input, shape index: {}]
  %s3 = inlined_call_operand.vmem [shape: f32[32,128], index: 3, kind: input, shape index: {}]
  %s4 = inlined_call_operand.vmem [shape: f32[128,128], index: 4, kind: input, shape index: {}]
  %s5 = inlined_call_operand.vmem [shape: f32[128,128], index: 5, kind: input, shape index: {}]
  %s6 = inlined_call_operand.vmem [shape: f32[32,128], index: 6, kind: input, shape index: {}]
  %s7 = inlined_call_operand.vmem [shape: f32[10,128], index: 7, kind: input, shape index: {}]
  %s8 = inlined_call_operand.vmem [shape: bf16[128,128], index: 8, kind: input, shape index: {}]
  %s9 = inlined_call_operand.vmem [shape: bf16[128,128], index: 9, kind: input, shape index: {}]
  %s10 = inlined_call_operand.vmem [shape: f32[2,8,128], index: 10, kind: output, shape index: {}]
  %s11 = sld [smem:[#allocation0]]
  $region61: #{vq_diffusion_forward.1} parent=0
    _
  %s13 = ssub.s32 1, %s11
  %s14 = scalar_select 0, %s13, %s11
  %s15 = sshll.u32 %s0, 4
  %s16 = int_to_ptr.vmem [resolvable:$true] %s15
  %18 = dma.vmem_to_smem %s16, 16, [#allocation3], [#allocation2]
  %s19 = sshll.u32 %s1, 4
  %s20 = int_to_ptr.vmem [resolvable:$true] %s19
  %22 = dma.vmem_to_smem %s20, 16, [#allocation4], [#allocation2]
  %s23 = sshll.u32 %s2, 4
  %s24 = int_to_ptr.vmem [resolvable:$true] %s23
  %26 = dma.vmem_to_smem %s24, 16, [#allocation5], [#allocation2]
  %27 = dma.done [#allocation2], 48
  %28 = sfence
  loop: start=0, step=1, limit=4
  $region2: #{vq_diffusion_forward.1} parent=0 // loop_pre_header
    _
  $region3: #{vq_diffusion_forward.1} parent=0 // loop_header
    %s30 = sphi 0, %s34
    %p31 = scmp.ge.s32.totalorder %s30, 4
    %s40 = sphi 0, %s42
    %s43 = sphi 0, %s40
    %s44 = sphi 0, %s43
    %s60 = sphi 0, %s44
    %s64 = sphi 0, %s64
    %s66 = sphi 0, %s64
    %s67 = sphi 0, %s66
    %s81 = sphi 0, %s67
    %s85 = sphi 0, %s85
    %s87 = sphi 0, %s85
    %s88 = sphi 0, %s87
    %s102 = sphi 0, %s88
    %s108 = sphi 0, %s110
    %s111 = sphi 0, %s108
    %s112 = sphi 0, %s111
    %s128 = sphi 0, %s112
    %s132 = sphi 0, %s132
    %s134 = sphi 0, %s132
    %s135 = sphi 0, %s134
    %s149 = sphi 0, %s135
    %s153 = sphi 0, %s153
    %s155 = sphi 0, %s153
    %s156 = sphi 0, %s155
    %s170 = sphi 0, %s156
    %s174 = sphi 0, %s174
    %s176 = sphi 0, %s174
    %s177 = sphi 0, %s176
    %s191 = sphi 0, %s177
    %s197 = sphi 0, %s199
    %s200 = sphi 0, %s197
    %s201 = sphi 0, %s200
    %s217 = sphi 0, %s201
  $region4: #{vq_diffusion_forward.1} parent=0 // loop_header_branch
    %33 = sbr.rel (%p31) target = $region8
  $region5: #{vq_diffusion_forward.1} parent=0 // loop_body
    %s35 = ssub.s32 %s30, 1
    %s36 = ssub.s32 %s30, 2
    %s37 = sadd.s32 %s30, 1
    %s38 = ssub.s32 %s30, %s37
    %p39 = scmp.eq.s32.totalorder %s38, 0
    %s41 = sadd.s32 %s40, 1
    %s42 = scalar_select %p39, %s40, %s41
    %p45 = pneg %p39
    %p46 = scmp.eq.s32.totalorder %s30, 1
    %p47 = por %p45, %p46
    %p48 = scmp.ne.s32.totalorder %s40, %s43
    %p49 = scmp.eq.s32.totalorder %s30, 0
    %p50 = por %p48, %p49
    %p51 = scmp.ne.s32.totalorder %s40, %s43
    %p52 = scmp.eq.s32.totalorder %s35, 1
    %p53 = por %p51, %p52
    %p54 = scmp.ne.s32.totalorder %s43, %s44
    %p55 = scmp.eq.s32.totalorder %s35, 0
    %p56 = por %p54, %p55
    %p57 = scmp.ne.s32.totalorder %s43, %s44
    %p58 = scmp.eq.s32.totalorder %s36, 1
    %p59 = por %p57, %p58
    %p61 = scmp.ne.s32.totalorder %s44, %s60
    %p62 = scmp.eq.s32.totalorder %s36, 0
    %p63 = por %p61, %p62
    %s65 = sadd.s32 %s64, 1
    %p68 = scmp.eq.s32.totalorder %s30, 1
    %p69 = scmp.ne.s32.totalorder %s64, %s66
    %p70 = scmp.eq.s32.totalorder %s30, 0
    %p71 = por %p69, %p70
    %p72 = scmp.ne.s32.totalorder %s64, %s66
    %p73 = scmp.eq.s32.totalorder %s35, 1
    %p74 = por %p72, %p73
    %p75 = scmp.ne.s32.totalorder %s66, %s67
    %p76 = scmp.eq.s32.totalorder %s35, 0
    %p77 = por %p75, %p76
    %p78 = scmp.ne.s32.totalorder %s66, %s67
    %p79 = scmp.eq.s32.totalorder %s36, 1
    %p80 = por %p78, %p79
    %p82 = scmp.ne.s32.totalorder %s67, %s81
    %p83 = scmp.eq.s32.totalorder %s36, 0
    %p84 = por %p82, %p83
    %s86 = sadd.s32 %s85, 1
    %p89 = scmp.eq.s32.totalorder %s30, 1
    %p90 = scmp.ne.s32.totalorder %s85, %s87
    %p91 = scmp.eq.s32.totalorder %s30, 0
    %p92 = por %p90, %p91
    %p93 = scmp.ne.s32.totalorder %s85, %s87
    %p94 = scmp.eq.s32.totalorder %s35, 1
    %p95 = por %p93, %p94
    %p96 = scmp.ne.s32.totalorder %s87, %s88
    %p97 = scmp.eq.s32.totalorder %s35, 0
    %p98 = por %p96, %p97
    %p99 = scmp.ne.s32.totalorder %s87, %s88
    %p100 = scmp.eq.s32.totalorder %s36, 1
    %p101 = por %p99, %p100
    %p103 = scmp.ne.s32.totalorder %s88, %s102
    %p104 = scmp.eq.s32.totalorder %s36, 0
    %p105 = por %p103, %p104
    %s106 = ssub.s32 %s30, %s37
    %p107 = scmp.eq.s32.totalorder %s106, 0
    %s109 = sadd.s32 %s108, 1
    %s110 = scalar_select %p107, %s108, %s109
    %p113 = pneg %p107
    %p114 = scmp.eq.s32.totalorder %s30, 1
    %p115 = por %p113, %p114
    %p116 = scmp.ne.s32.totalorder %s108, %s111
    %p117 = scmp.eq.s32.totalorder %s30, 0
    %p118 = por %p116, %p117
    %p119 = scmp.ne.s32.totalorder %s108, %s111
    %p120 = scmp.eq.s32.totalorder %s35, 1
    %p121 = por %p119, %p120
    %p122 = scmp.ne.s32.totalorder %s111, %s112
    %p123 = scmp.eq.s32.totalorder %s35, 0
    %p124 = por %p122, %p123
    %p125 = scmp.ne.s32.totalorder %s111, %s112
    %p126 = scmp.eq.s32.totalorder %s36, 1
    %p127 = por %p125, %p126
    %p129 = scmp.ne.s32.totalorder %s112, %s128
    %p130 = scmp.eq.s32.totalorder %s36, 0
    %p131 = por %p129, %p130
    %s133 = sadd.s32 %s132, 1
    %p136 = scmp.eq.s32.totalorder %s30, 1
    %p137 = scmp.ne.s32.totalorder %s132, %s134
    %p138 = scmp.eq.s32.totalorder %s30, 0
    %p139 = por %p137, %p138
    %p140 = scmp.ne.s32.totalorder %s132, %s134
    %p141 = scmp.eq.s32.totalorder %s35, 1
    %p142 = por %p140, %p141
    %p143 = scmp.ne.s32.totalorder %s134, %s135
    %p144 = scmp.eq.s32.totalorder %s35, 0
    %p145 = por %p143, %p144
    %p146 = scmp.ne.s32.totalorder %s134, %s135
    %p147 = scmp.eq.s32.totalorder %s36, 1
    %p148 = por %p146, %p147
    %p150 = scmp.ne.s32.totalorder %s135, %s149
    %p151 = scmp.eq.s32.totalorder %s36, 0
    %p152 = por %p150, %p151
    %s154 = sadd.s32 %s153, 1
    %p157 = scmp.eq.s32.totalorder %s30, 1
    %p158 = scmp.ne.s32.totalorder %s153, %s155
    %p159 = scmp.eq.s32.totalorder %s30, 0
    %p160 = por %p158, %p159
    %p161 = scmp.ne.s32.totalorder %s153, %s155
    %p162 = scmp.eq.s32.totalorder %s35, 1
    %p163 = por %p161, %p162
    %p164 = scmp.ne.s32.totalorder %s155, %s156
    %p165 = scmp.eq.s32.totalorder %s35, 0
    %p166 = por %p164, %p165
    %p167 = scmp.ne.s32.totalorder %s155, %s156
    %p168 = scmp.eq.s32.totalorder %s36, 1
    %p169 = por %p167, %p168
    %p171 = scmp.ne.s32.totalorder %s156, %s170
    %p172 = scmp.eq.s32.totalorder %s36, 0
    %p173 = por %p171, %p172
    %s175 = sadd.s32 %s174, 1
    %p178 = scmp.eq.s32.totalorder %s30, 1
    %p179 = scmp.ne.s32.totalorder %s174, %s176
    %p180 = scmp.eq.s32.totalorder %s30, 0
    %p181 = por %p179, %p180
    %p182 = scmp.ne.s32.totalorder %s174, %s176
    %p183 = scmp.eq.s32.totalorder %s35, 1
    %p184 = por %p182, %p183
    %p185 = scmp.ne.s32.totalorder %s176, %s177
    %p186 = scmp.eq.s32.totalorder %s35, 0
    %p187 = por %p185, %p186
    %p188 = scmp.ne.s32.totalorder %s176, %s177
    %p189 = scmp.eq.s32.totalorder %s36, 1
    %p190 = por %p188, %p189
    %p192 = scmp.ne.s32.totalorder %s177, %s191
    %p193 = scmp.eq.s32.totalorder %s36, 0
    %p194 = por %p192, %p193
    %s195 = ssub.s32 %s30, %s37
    %p196 = scmp.eq.s32.totalorder %s195, 0
    %s198 = sadd.s32 %s197, 1
    %s199 = scalar_select %p196, %s197, %s198
    %p202 = pneg %p196
    %p203 = scmp.eq.s32.totalorder %s30, 1
    %p204 = por %p202, %p203
    %p205 = scmp.ne.s32.totalorder %s197, %s200
    %p206 = scmp.eq.s32.totalorder %s30, 0
    %p207 = por %p205, %p206
    %p208 = scmp.ne.s32.totalorder %s197, %s200
    %p209 = scmp.eq.s32.totalorder %s35, 1
    %p210 = por %p208, %p209
    %p211 = scmp.ne.s32.totalorder %s200, %s201
    %p212 = scmp.eq.s32.totalorder %s35, 0
    %p213 = por %p211, %p212
    %p214 = scmp.ne.s32.totalorder %s200, %s201
    %p215 = scmp.eq.s32.totalorder %s36, 1
    %p216 = por %p214, %p215
    %p218 = scmp.ne.s32.totalorder %s201, %s217
    %p219 = scmp.eq.s32.totalorder %s36, 0
    %p220 = por %p218, %p219
    %p221 = scmp.le.s32.totalorder 1, %s30
    %p222 = scmp.lt.s32.totalorder %s30, 3
    %p223 = pnand %p221, %p222
    %p224 = pneg %p223
    // Predicated region
    $region9: #{vq_diffusion_forward.1} parent=5 // pred_check
      _
    $region10: #{vq_diffusion_forward.1} parent=5 // pred_check_branch
      %226 = sbr.rel (%p223) target = $region12
    $region11: #{vq_diffusion_forward.1} parent=5 // pred_region
      %s227 = ssub.s32 %s30, 1
      // Predicated region
      $region13: #{vq_diffusion_forward.1} parent=11 // pred_check
        %p228 = pneg %p77
      $region14: #{vq_diffusion_forward.1} parent=11 // pred_check_branch
        %230 = sbr.rel (%p228) target = $region16
      $region15: #{vq_diffusion_forward.1} parent=11 // pred_region
        _
      $region16: #{vq_diffusion_forward.1} parent=11 // pred_fallthru
        _
      // Predicated region
      $region17: #{vq_diffusion_forward.1} parent=11 // pred_check
        %p231 = pneg %p98
      $region18: #{vq_diffusion_forward.1} parent=11 // pred_check_branch
        %233 = sbr.rel (%p231) target = $region20
      $region19: #{vq_diffusion_forward.1} parent=11 // pred_region
        _
      $region20: #{vq_diffusion_forward.1} parent=11 // pred_fallthru
        _
      // Predicated region
      $region21: #{vq_diffusion_forward.1} parent=11 // pred_check
        %p234 = pneg %p145
      $region22: #{vq_diffusion_forward.1} parent=11 // pred_check_branch
        %236 = sbr.rel (%p234) target = $region24
      $region23: #{vq_diffusion_forward.1} parent=11 // pred_region
        _
      $region24: #{vq_diffusion_forward.1} parent=11 // pred_fallthru
        _
      // Predicated region
      $region25: #{vq_diffusion_forward.1} parent=11 // pred_check
        %p237 = pneg %p166
      $region26: #{vq_diffusion_forward.1} parent=11 // pred_check_branch
        %239 = sbr.rel (%p237) target = $region28
      $region27: #{vq_diffusion_forward.1} parent=11 // pred_region
        _
      $region28: #{vq_diffusion_forward.1} parent=11 // pred_fallthru
        _
      // Predicated region
      $region29: #{vq_diffusion_forward.1} parent=11 // pred_check
        %p240 = pneg %p187
      $region30: #{vq_diffusion_forward.1} parent=11 // pred_check_branch
        %242 = sbr.rel (%p240) target = $region32
      $region31: #{vq_diffusion_forward.1} parent=11 // pred_region
        _
      $region32: #{vq_diffusion_forward.1} parent=11 // pred_fallthru
        _
    $region12: #{vq_diffusion_forward.1} parent=5 // pred_fallthru
      _
    %p243 = scmp.lt.s32.totalorder %s30, 2
    // Predicated region
    $region33: #{vq_diffusion_forward.1} parent=5 // pred_check
      %p244 = pneg %p243
    $region34: #{vq_diffusion_forward.1} parent=5 // pred_check_branch
      %246 = sbr.rel (%p244) target = $region36
    $region35: #{vq_diffusion_forward.1} parent=5 // pred_region
      // Predicated region
      $region37: #{vq_diffusion_forward.1} parent=35 // pred_check
        %p247 = pneg %p50
      $region38: #{vq_diffusion_forward.1} parent=35 // pred_check_branch
        %249 = sbr.rel (%p247) target = $region40
      $region39: #{vq_diffusion_forward.1} parent=35 // pred_region
        %s250 = smul.u32 2, %s30
        %p251 = scmp.lt.s32.totalorder %s250, 3
        %s252 = scalar_select %p251, %s250, 3
        %s253 = smul.addr %s252, 8
        %s254 = scalar_lea.vmem %s3, %s253
        %s255 = smul.u32 2, %s30
      $region40: #{vq_diffusion_forward.1} parent=35 // pred_fallthru
        _
      // Predicated region
      $region41: #{vq_diffusion_forward.1} parent=35 // pred_check
        %p256 = pneg %p118
      $region42: #{vq_diffusion_forward.1} parent=35 // pred_check_branch
        %258 = sbr.rel (%p256) target = $region44
      $region43: #{vq_diffusion_forward.1} parent=35 // pred_region
        %s259 = smul.u32 2, %s30
        %p260 = scmp.lt.s32.totalorder %s259, 3
        %s261 = scalar_select %p260, %s259, 3
        %s262 = smul.addr %s261, 8
        %s263 = scalar_lea.vmem %s6, %s262
        %s264 = smul.u32 2, %s30
      $region44: #{vq_diffusion_forward.1} parent=35 // pred_fallthru
        _
    $region36: #{vq_diffusion_forward.1} parent=5 // pred_fallthru
      _
    %p265 = scmp.le.s32.totalorder 1, %s30
    %p266 = scmp.lt.s32.totalorder %s30, 3
    %p267 = pnand %p265, %p266
    %p268 = pneg %p267
    // Predicated region
    $region45: #{vq_diffusion_forward.1} parent=5 // pred_check
      _
    $region46: #{vq_diffusion_forward.1} parent=5 // pred_check_branch
      %270 = sbr.rel (%p267) target = $region48
    $region47: #{vq_diffusion_forward.1} parent=5 // pred_region
      %s271 = ssub.s32 %s30, 1
      %s272 = smul.u32 2, %s35
      %p273 = scmp.lt.s32.totalorder %s272, 3
      %s274 = scalar_select %p273, %s272, 3
      %s275 = smul.addr %s274, 8
      %s276 = scalar_lea.vmem %s3, %s275
      %p277 = pneg %p56
      %p278 = pneg %p53
      %p279 = pneg %p77
      %p280 = pneg %p74
      %p281 = pneg %p98
      %p282 = pneg %p95
      %s283 = smul.u32 2, %s35
      %p284 = scmp.lt.s32.totalorder %s283, 3
      %s285 = scalar_select %p284, %s283, 3
      %s286 = smul.addr %s285, 8
      %s287 = scalar_lea.vmem %s6, %s286
      %p288 = pneg %p124
      %p289 = pneg %p121
      %p290 = pneg %p145
      %p291 = pneg %p142
      %p292 = pneg %p166
      %p293 = pneg %p163
      %p294 = pneg %p187
      %p295 = pneg %p184
      %p296 = pneg %p213
      %p297 = pneg %p210
      %p298 = scmp.lt.s32.totalorder %s35, 1
      %s299 = scalar_select %p298, %s35, 1
      %s300 = smul.addr %s299, 8
      %s301 = scalar_lea.vmem %s10, %s300
      %s302 = smul.u32 2, %s35
      %p303 = scmp.lt.s32.totalorder %s302, 3
      %s304 = scalar_select %p303, %s302, 3
      %s305 = smul.addr %s304, 8
      %s306 = scalar_lea.vmem %s3, %s305
      %s307 = smul.u32 2, %s35
      %s308 = smul.u32 2, %s35
      %p309 = scmp.lt.s32.totalorder %s308, 3
      %s310 = scalar_select %p309, %s308, 3
      %s311 = smul.addr %s310, 8
      %s312 = scalar_lea.vmem %s6, %s311
      %s313 = smul.u32 2, %s35
      %p314 = scmp.lt.s32.totalorder %s35, 1
      %s315 = scalar_select %p314, %s35, 1
      %s316 = smul.addr %s315, 8
      %s317 = scalar_lea.vmem %s10, %s316
      %s319 = sld [smem:[#allocation3 + %s35]]
      %s320 = sld [smem:[#allocation4 + %s319]]
      %s321 = sld [smem:[#allocation5 + %s319]]
      %v322 = vld [vmem:[%s306] sm:$0xff]
      %v323 = vld [vmem:[%s306 + $0x8] sm:$0xff]
      %v324 = vld [vmem:[%s4] sm:$0xff]
      %v325 = vld [vmem:[%s4 + $0x8] sm:$0xff]
      %v326 = vld [vmem:[%s4 + $0x10] sm:$0xff]
      %v327 = vld [vmem:[%s4 + $0x18] sm:$0xff]
      %v328 = vld [vmem:[%s4 + $0x20] sm:$0xff]
      %v329 = vld [vmem:[%s4 + $0x28] sm:$0xff]
      %v330 = vld [vmem:[%s4 + $0x30] sm:$0xff]
      %v331 = vld [vmem:[%s4 + $0x38] sm:$0xff]
      %v332 = vld [vmem:[%s4 + $0x40] sm:$0xff]
      %v333 = vld [vmem:[%s4 + $0x48] sm:$0xff]
      %v334 = vld [vmem:[%s4 + $0x50] sm:$0xff]
      %v335 = vld [vmem:[%s4 + $0x58] sm:$0xff]
      %v336 = vld [vmem:[%s4 + $0x60] sm:$0xff]
      %v337 = vld [vmem:[%s4 + $0x68] sm:$0xff]
      %v338 = vld [vmem:[%s4 + $0x70] sm:$0xff]
      %v339 = vld [vmem:[%s4 + $0x78] sm:$0xff]
      %340 = vmatprep.subr.mxu0 0.0
      %341 = vmatpush1.msra.mxu0 %v324
      %342 = vmatprep.subr.mxu0 0.0
      %343 = vmatpush1.msra.mxu0 %v325
      %344 = vmatprep.subr.mxu0 0.0
      %345 = vmatpush1.msra.mxu0 %v326
      %346 = vmatprep.subr.mxu0 0.0
      %347 = vmatpush1.msra.mxu0 %v327
      %348 = vmatprep.subr.mxu0 0.0
      %349 = vmatpush1.msra.mxu0 %v328
      %350 = vmatprep.subr.mxu0 0.0
      %351 = vmatpush1.msra.mxu0 %v329
      %352 = vmatprep.subr.mxu0 0.0
      %353 = vmatpush1.msra.mxu0 %v330
      %354 = vmatprep.subr.mxu0 0.0
      %355 = vmatpush1.msra.mxu0 %v331
      %356 = vmatprep.subr.mxu0 0.0
      %357 = vmatpush1.msra.mxu0 %v332
      %358 = vmatprep.subr.mxu0 0.0
      %359 = vmatpush1.msra.mxu0 %v333
      %360 = vmatprep.subr.mxu0 0.0
      %361 = vmatpush1.msra.mxu0 %v334
      %362 = vmatprep.subr.mxu0 0.0
      %363 = vmatpush1.msra.mxu0 %v335
      %364 = vmatprep.subr.mxu0 0.0
      %365 = vmatpush1.msra.mxu0 %v336
      %366 = vmatprep.subr.mxu0 0.0
      %367 = vmatpush1.msra.mxu0 %v337
      %368 = vmatprep.subr.mxu0 0.0
      %369 = vmatpush1.msra.mxu0 %v338
      %370 = vmatprep.subr.mxu0 0.0
      %371 = vmatpush1.msra.mxu0 %v339
      %372 = vmatprep.subr.mxu0 0.0
      %373 = vmatpush1.msra.mxu0 0.0
      %374 = vmatprep.subr.mxu0 0.0
      %375 = vmatpush1.msra.mxu0 0.0
      %376 = vmatprep.subr.mxu0 0.0
      %377 = vmatpush1.msra.mxu0 0.0
      %378 = vmatprep.subr.mxu0 0.0
      %379 = vmatpush1.msra.mxu0 0.0
      %380 = vmatprep.subr.mxu0 0.0
      %381 = vmatpush1.msra.mxu0 0.0
      %382 = vmatprep.subr.mxu0 0.0
      %383 = vmatpush1.msra.mxu0 0.0
      %384 = vmatprep.subr.mxu0 0.0
      %385 = vmatpush1.msra.mxu0 0.0
      %386 = vmatprep.subr.mxu0 0.0
      %387 = vmatpush1.msra.mxu0 0.0
      %388 = vmatprep.subr.mxu0 0.0
      %389 = vmatpush1.msra.mxu0 0.0
      %390 = vmatprep.subr.mxu0 0.0
      %391 = vmatpush1.msra.mxu0 0.0
      %392 = vmatprep.subr.mxu0 0.0
      %393 = vmatpush1.msra.mxu0 0.0
      %394 = vmatprep.subr.mxu0 0.0
      %395 = vmatpush1.msra.mxu0 0.0
      %396 = vmatprep.subr.mxu0 0.0
      %397 = vmatpush1.msra.mxu0 0.0
      %398 = vmatprep.subr.mxu0 0.0
      %399 = vmatpush1.msra.mxu0 0.0
      %400 = vmatprep.subr.mxu0 0.0
      %401 = vmatpush1.msra.mxu0 0.0
      %402 = vmatprep.subr.mxu0 0.0
      %403 = vmatpush1.msra.mxu0 0.0
      %404 = vmatprep.mubr.f32.mxu0 0.0
      %405 = vmatmul.mubr.f32.gmra.mrb[0].mxu0 %v322
      %v406 = vpop.f32.mrb[0].mxu0
      %v407 = vadd.f32 0.0, %v406
      %v408 = vpop.f32.mrb[0].mxu0
      %409 = vmatprep.mubr.f32.mxu0 0.0
      %410 = vmatmul.mubr.f32.gmra.mrb[0].mxu0 %v323
      %v411 = vpop.f32.mrb[0].mxu0
      %v412 = vadd.f32 0.0, %v411
      %v413 = vpop.f32.mrb[0].mxu0
      %414 = vdwg.mxu0
      %v415 = vld [vmem:[%s5] sm:$0xff]
      %v416 = vld [vmem:[%s5 + $0x8] sm:$0xff]
      %v417 = vld [vmem:[%s5 + $0x10] sm:$0xff]
      %v418 = vld [vmem:[%s5 + $0x18] sm:$0xff]
      %v419 = vld [vmem:[%s5 + $0x20] sm:$0xff]
      %v420 = vld [vmem:[%s5 + $0x28] sm:$0xff]
      %v421 = vld [vmem:[%s5 + $0x30] sm:$0xff]
      %v422 = vld [vmem:[%s5 + $0x38] sm:$0xff]
      %v423 = vld [vmem:[%s5 + $0x40] sm:$0xff]
      %v424 = vld [vmem:[%s5 + $0x48] sm:$0xff]
      %v425 = vld [vmem:[%s5 + $0x50] sm:$0xff]
      %v426 = vld [vmem:[%s5 + $0x58] sm:$0xff]
      %v427 = vld [vmem:[%s5 + $0x60] sm:$0xff]
      %v428 = vld [vmem:[%s5 + $0x68] sm:$0xff]
      %v429 = vld [vmem:[%s5 + $0x70] sm:$0xff]
      %v430 = vld [vmem:[%s5 + $0x78] sm:$0xff]
      %431 = vmatprep.subr.mxu0 0.0
      %432 = vmatpush1.msra.mxu0 %v415
      %433 = vmatprep.subr.mxu0 0.0
      %434 = vmatpush1.msra.mxu0 %v416
      %435 = vmatprep.subr.mxu0 0.0
      %436 = vmatpush1.msra.mxu0 %v417
      %437 = vmatprep.subr.mxu0 0.0
      %438 = vmatpush1.msra.mxu0 %v418
      %439 = vmatprep.subr.mxu0 0.0
      %440 = vmatpush1.msra.mxu0 %v419
      %441 = vmatprep.subr.mxu0 0.0
      %442 = vmatpush1.msra.mxu0 %v420
      %443 = vmatprep.subr.mxu0 0.0
      %444 = vmatpush1.msra.mxu0 %v421
      %445 = vmatprep.subr.mxu0 0.0
      %446 = vmatpush1.msra.mxu0 %v422
      %447 = vmatprep.subr.mxu0 0.0
      %448 = vmatpush1.msra.mxu0 %v423
      %449 = vmatprep.subr.mxu0 0.0
      %450 = vmatpush1.msra.mxu0 %v424
      %451 = vmatprep.subr.mxu0 0.0
      %452 = vmatpush1.msra.mxu0 %v425
      %453 = vmatprep.subr.mxu0 0.0
      %454 = vmatpush1.msra.mxu0 %v426
      %455 = vmatprep.subr.mxu0 0.0
      %456 = vmatpush1.msra.mxu0 %v427
      %457 = vmatprep.subr.mxu0 0.0
      %458 = vmatpush1.msra.mxu0 %v428
      %459 = vmatprep.subr.mxu0 0.0
      %460 = vmatpush1.msra.mxu0 %v429
      %461 = vmatprep.subr.mxu0 0.0
      %462 = vmatpush1.msra.mxu0 %v430
      %463 = vmatprep.subr.mxu0 0.0
      %464 = vmatpush1.msra.mxu0 0.0
      %465 = vmatprep.subr.mxu0 0.0
      %466 = vmatpush1.msra.mxu0 0.0
      %467 = vmatprep.subr.mxu0 0.0
      %468 = vmatpush1.msra.mxu0 0.0
      %469 = vmatprep.subr.mxu0 0.0
      %470 = vmatpush1.msra.mxu0 0.0
      %471 = vmatprep.subr.mxu0 0.0
      %472 = vmatpush1.msra.mxu0 0.0
      %473 = vmatprep.subr.mxu0 0.0
      %474 = vmatpush1.msra.mxu0 0.0
      %475 = vmatprep.subr.mxu0 0.0
      %476 = vmatpush1.msra.mxu0 0.0
      %477 = vmatprep.subr.mxu0 0.0
      %478 = vmatpush1.msra.mxu0 0.0
      %479 = vmatprep.subr.mxu0 0.0
      %480 = vmatpush1.msra.mxu0 0.0
      %481 = vmatprep.subr.mxu0 0.0
      %482 = vmatpush1.msra.mxu0 0.0
      %483 = vmatprep.subr.mxu0 0.0
      %484 = vmatpush1.msra.mxu0 0.0
      %485 = vmatprep.subr.mxu0 0.0
      %486 = vmatpush1.msra.mxu0 0.0
      %487 = vmatprep.subr.mxu0 0.0
      %488 = vmatpush1.msra.mxu0 0.0
      %489 = vmatprep.subr.mxu0 0.0
      %490 = vmatpush1.msra.mxu0 0.0
      %491 = vmatprep.subr.mxu0 0.0
      %492 = vmatpush1.msra.mxu0 0.0
      %493 = vmatprep.subr.mxu0 0.0
      %494 = vmatpush1.msra.mxu0 0.0
      %495 = vmatprep.mubr.f32.mxu0 0.0
      %496 = vmatmul.mubr.f32.gmra.mrb[0].mxu0 %v407
      %v497 = vpop.f32.mrb[0].mxu0
      %v498 = vadd.f32 0.0, %v497
      %v499 = vpop.f32.mrb[0].mxu0
      %500 = vmatprep.mubr.f32.mxu0 0.0
      %501 = vmatmul.mubr.f32.gmra.mrb[0].mxu0 %v412
      %v502 = vpop.f32.mrb[0].mxu0
      %v503 = vadd.f32 0.0, %v502
      %v504 = vpop.f32.mrb[0].mxu0
      %505 = vdwg.mxu0
      %v506 = vlaneseq
      %v507 = vand.u32 %v506, 127
      %vm508 = vcmp.lt.s32.totalorder %v507, 32
      %v509 = vsel %vm508, %v498, inf
      %v510 = vsel %vm508, %v503, inf
      %511 = vmin.xlane.f32.xlu0 %v509
      %v512 = vpop.xlane.xlu0 %511
      %513 = vmin.xlane.f32.xlu0 %v510
      %v514 = vpop.xlane.xlu0 %513
      %vm515 = vcmp.eq.f32.partialorder %v509, %v512
      %vm516 = vcmp.eq.f32.partialorder %v510, %v514
      %v517 = vsel %vm515, 1, 0
      %v518 = vsel %vm516, 1, 0
      %v519 = vcvt.s32.f32 %v517
      %v520 = vcvt.s32.f32 %v518
      %v521 = vmul.f32 %v519, 2.0
      %v522 = vmul.f32 %v520, 2.0
      %v523 = vsub.f32 %v521, 1.0
      %v524 = vsub.f32 %v522, 1.0
      %v525 = vstv %s320
      %v526 = vmul.f32 %v525, %v523
      %v527 = vmul.f32 %v525, %v524
      %v528 = vld [vmem:[%s312] sm:$0xff]
      %v529 = vld [vmem:[%s312 + $0x8] sm:$0xff]
      %v530 = vstv %s321
      %v531 = vmul.f32 %v530, %v528
      %v532 = vmul.f32 %v530, %v529
      %v533 = vadd.f32 %v526, %v531
      %v534 = vadd.f32 %v527, %v532
      %s535 = scalar_lea.vmem %s7, %s319
      %v536 = vld [vmem:[%s535] sm:$0x1]
      %v537 = vpack.c.bf16 %v534, %v533
      %v538 = vld [vmem:[%s8] sm:$0xf]
      %v539 = vld [vmem:[%s8 + $0x4] sm:$0xf]
      %v540 = vld [vmem:[%s8 + $0x8] sm:$0xf]
      %v541 = vld [vmem:[%s8 + $0xc] sm:$0xf]
      %v542 = vld [vmem:[%s8 + $0x10] sm:$0xf]
      %v543 = vld [vmem:[%s8 + $0x14] sm:$0xf]
      %v544 = vld [vmem:[%s8 + $0x18] sm:$0xf]
      %v545 = vld [vmem:[%s8 + $0x1c] sm:$0xf]
      %v546 = vld [vmem:[%s8 + $0x20] sm:$0xf]
      %v547 = vld [vmem:[%s8 + $0x24] sm:$0xf]
      %v548 = vld [vmem:[%s8 + $0x28] sm:$0xf]
      %v549 = vld [vmem:[%s8 + $0x2c] sm:$0xf]
      %v550 = vld [vmem:[%s8 + $0x30] sm:$0xf]
      %v551 = vld [vmem:[%s8 + $0x34] sm:$0xf]
      %v552 = vld [vmem:[%s8 + $0x38] sm:$0xf]
      %v553 = vld [vmem:[%s8 + $0x3c] sm:$0xf]
      %v554 = vlaneseq
      %v555 = vshrl.u32 %v554, 7
      %v556 = vsub.s32 0, %v555
      %v557 = vrot.slane %v536, %v556
      %v574 = vunpack.c.l.b16 %v538
      %v575 = vunpack.c.l.b16 %v539
      %v576 = vunpack.c.l.b16 %v540
      %v577 = vunpack.c.l.b16 %v541
      %v578 = vunpack.c.l.b16 %v542
      %v579 = vunpack.c.l.b16 %v543
      %v580 = vunpack.c.l.b16 %v544
      %v581 = vunpack.c.l.b16 %v545
      %v582 = vunpack.c.l.b16 %v546
      %v583 = vunpack.c.l.b16 %v547
      %v584 = vunpack.c.l.b16 %v548
      %v585 = vunpack.c.l.b16 %v549
      %v586 = vunpack.c.l.b16 %v550
      %v587 = vunpack.c.l.b16 %v551
      %v588 = vunpack.c.l.b16 %v552
      %v589 = vunpack.c.l.b16 %v553
      %v590 = vpack.c.b16 %v575, %v574
      %v591 = vpack.c.b16 %v577, %v576
      %v592 = vpack.c.b16 %v579, %v578
      %v593 = vpack.c.b16 %v581, %v580
      %v594 = vpack.c.b16 %v583, %v582
      %v595 = vpack.c.b16 %v585, %v584
      %v596 = vpack.c.b16 %v587, %v586
      %v597 = vpack.c.b16 %v589, %v588
      %606 = vmatprep.subr.bf16.mxu0 0
      %607 = vmatpush1.bf16.msra.mxu0 %v590
      %608 = vmatprep.subr.bf16.mxu0 0
      %609 = vmatpush1.bf16.msra.mxu0 %v591
      %610 = vmatprep.subr.bf16.mxu0 0
      %611 = vmatpush1.bf16.msra.mxu0 %v592
      %612 = vmatprep.subr.bf16.mxu0 0
      %613 = vmatpush1.bf16.msra.mxu0 %v593
      %614 = vmatprep.subr.bf16.mxu0 0
      %615 = vmatpush1.bf16.msra.mxu0 %v594
      %616 = vmatprep.subr.bf16.mxu0 0
      %617 = vmatpush1.bf16.msra.mxu0 %v595
      %618 = vmatprep.subr.bf16.mxu0 0
      %619 = vmatpush1.bf16.msra.mxu0 %v596
      %620 = vmatprep.subr.bf16.mxu0 0
      %621 = vmatpush1.bf16.msra.mxu0 %v597
      %622 = vmatprep.subr.bf16.mxu0 0
      %623 = vmatpush1.bf16.msra.mxu0 0
      %624 = vmatprep.subr.bf16.mxu0 0
      %625 = vmatpush1.bf16.msra.mxu0 0
      %626 = vmatprep.subr.bf16.mxu0 0
      %627 = vmatpush1.bf16.msra.mxu0 0
      %628 = vmatprep.subr.bf16.mxu0 0
      %629 = vmatpush1.bf16.msra.mxu0 0
      %630 = vmatprep.subr.bf16.mxu0 0
      %631 = vmatpush1.bf16.msra.mxu0 0
      %632 = vmatprep.subr.bf16.mxu0 0
      %633 = vmatpush1.bf16.msra.mxu0 0
      %634 = vmatprep.subr.bf16.mxu0 0
      %635 = vmatpush1.bf16.msra.mxu0 0
      %636 = vmatprep.subr.bf16.mxu0 0
      %637 = vmatpush1.bf16.msra.mxu0 0
      %638 = vmatprep.mubr.bf16.mxu0 0
      %639 = vmatmul.mubr.bf16.gmra.mrb[0].mxu0 %v537
      %v640 = vpop.f32.mrb[0].mxu0
      %v641 = vadd.f32 %v557, %v640
      %v642 = vpop.f32.mrb[0].mxu0
      %v643 = vpop.f32.mrb[0].mxu0
      %v644 = vadd.f32 %v557, %v643
      %v645 = vpop.f32.mrb[0].mxu0
      %646 = vdwg.mxu0
      %v647 = vmax.f32 %v641, 0.0
      %v648 = vmax.f32 %v644, 0.0
      %v649 = vpack.c.bf16 %v648, %v647
      %v650 = vld [vmem:[%s9] sm:$0xf]
      %v651 = vld [vmem:[%s9 + $0x4] sm:$0xf]
      %v652 = vld [vmem:[%s9 + $0x8] sm:$0xf]
      %v653 = vld [vmem:[%s9 + $0xc] sm:$0xf]
      %v654 = vld [vmem:[%s9 + $0x10] sm:$0xf]
      %v655 = vld [vmem:[%s9 + $0x14] sm:$0xf]
      %v656 = vld [vmem:[%s9 + $0x18] sm:$0xf]
      %v657 = vld [vmem:[%s9 + $0x1c] sm:$0xf]
      %v658 = vld [vmem:[%s9 + $0x20] sm:$0xf]
      %v659 = vld [vmem:[%s9 + $0x24] sm:$0xf]
      %v660 = vld [vmem:[%s9 + $0x28] sm:$0xf]
      %v661 = vld [vmem:[%s9 + $0x2c] sm:$0xf]
      %v662 = vld [vmem:[%s9 + $0x30] sm:$0xf]
      %v663 = vld [vmem:[%s9 + $0x34] sm:$0xf]
      %v664 = vld [vmem:[%s9 + $0x38] sm:$0xf]
      %v665 = vld [vmem:[%s9 + $0x3c] sm:$0xf]
      %v682 = vunpack.c.l.b16 %v650
      %v683 = vunpack.c.l.b16 %v651
      %v684 = vunpack.c.l.b16 %v652
      %v685 = vunpack.c.l.b16 %v653
      %v686 = vunpack.c.l.b16 %v654
      %v687 = vunpack.c.l.b16 %v655
      %v688 = vunpack.c.l.b16 %v656
      %v689 = vunpack.c.l.b16 %v657
      %v690 = vunpack.c.l.b16 %v658
      %v691 = vunpack.c.l.b16 %v659
      %v692 = vunpack.c.l.b16 %v660
      %v693 = vunpack.c.l.b16 %v661
      %v694 = vunpack.c.l.b16 %v662
      %v695 = vunpack.c.l.b16 %v663
      %v696 = vunpack.c.l.b16 %v664
      %v697 = vunpack.c.l.b16 %v665
      %v698 = vpack.c.b16 %v683, %v682
      %v699 = vpack.c.b16 %v685, %v684
      %v700 = vpack.c.b16 %v687, %v686
      %v701 = vpack.c.b16 %v689, %v688
      %v702 = vpack.c.b16 %v691, %v690
      %v703 = vpack.c.b16 %v693, %v692
      %v704 = vpack.c.b16 %v695, %v694
      %v705 = vpack.c.b16 %v697, %v696
      %714 = vmatprep.subr.bf16.mxu0 0
      %715 = vmatpush1.bf16.msra.mxu0 %v698
      %716 = vmatprep.subr.bf16.mxu0 0
      %717 = vmatpush1.bf16.msra.mxu0 %v699
      %718 = vmatprep.subr.bf16.mxu0 0
      %719 = vmatpush1.bf16.msra.mxu0 %v700
      %720 = vmatprep.subr.bf16.mxu0 0
      %721 = vmatpush1.bf16.msra.mxu0 %v701
      %722 = vmatprep.subr.bf16.mxu0 0
      %723 = vmatpush1.bf16.msra.mxu0 %v702
      %724 = vmatprep.subr.bf16.mxu0 0
      %725 = vmatpush1.bf16.msra.mxu0 %v703
      %726 = vmatprep.subr.bf16.mxu0 0
      %727 = vmatpush1.bf16.msra.mxu0 %v704
      %728 = vmatprep.subr.bf16.mxu0 0
      %729 = vmatpush1.bf16.msra.mxu0 %v705
      %730 = vmatprep.subr.bf16.mxu0 0
      %731 = vmatpush1.bf16.msra.mxu0 0
      %732 = vmatprep.subr.bf16.mxu0 0
      %733 = vmatpush1.bf16.msra.mxu0 0
      %734 = vmatprep.subr.bf16.mxu0 0
      %735 = vmatpush1.bf16.msra.mxu0 0
      %736 = vmatprep.subr.bf16.mxu0 0
      %737 = vmatpush1.bf16.msra.mxu0 0
      %738 = vmatprep.subr.bf16.mxu0 0
      %739 = vmatpush1.bf16.msra.mxu0 0
      %740 = vmatprep.subr.bf16.mxu0 0
      %741 = vmatpush1.bf16.msra.mxu0 0
      %742 = vmatprep.subr.bf16.mxu0 0
      %743 = vmatpush1.bf16.msra.mxu0 0
      %744 = vmatprep.subr.bf16.mxu0 0
      %745 = vmatpush1.bf16.msra.mxu0 0
      %746 = vmatprep.mubr.bf16.mxu0 0
      %747 = vmatmul.mubr.bf16.gmra.mrb[0].mxu0 %v649
      %v748 = vpop.f32.mrb[0].mxu0
      %v749 = vadd.f32 0.0, %v748
      %v750 = vpop.f32.mrb[0].mxu0
      %v751 = vpop.f32.mrb[0].mxu0
      %v752 = vadd.f32 0.0, %v751
      %v753 = vpop.f32.mrb[0].mxu0
      %754 = vdwg.mxu0
      %v755 = vsub.f32 %v749, %v528
      %v756 = vsub.f32 %v752, %v529
      %v757 = vmul.f32 %v755, %v755
      %v758 = vmul.f32 %v756, %v756
      %v759 = vadd.f32 %v757, %v758
      %760 = vadd.xlane.f32.xlu0 %v759
      %v761 = vpop.xlane.xlu0 %760
      %v762 = vrot.slane %v761, 4
      %v763 = vadd.f32 %v761, %v762
      %v764 = vrot.slane %v763, 2
      %v765 = vadd.f32 %v763, %v764
      %v766 = vrot.slane %v765, 1
      %v767 = vadd.f32 %v765, %v766
      %s768 = vtos %v767
      %v769 = vstv %s768
      %770 = vst [vmem:[%s317] sm:$0xff] %v769
      %p771 = scmp.lt.s32.totalorder %s35, 1
      %s772 = scalar_select %p771, %s35, 1
      %s773 = smul.addr %s772, 8
      %s774 = scalar_lea.vmem %s10, %s773
      // Predicated region
      $region49: #{vq_diffusion_forward.1} parent=47 // pred_check
        %p775 = pneg %p210
      $region50: #{vq_diffusion_forward.1} parent=47 // pred_check_branch
        %777 = sbr.rel (%p775) target = $region52
      $region51: #{vq_diffusion_forward.1} parent=47 // pred_region
        _
      $region52: #{vq_diffusion_forward.1} parent=47 // pred_fallthru
        _
    $region48: #{vq_diffusion_forward.1} parent=5 // pred_fallthru
      _
    %p778 = scmp.le.s32.totalorder 2, %s30
    // Predicated region
    $region53: #{vq_diffusion_forward.1} parent=5 // pred_check
      %p779 = pneg %p778
    $region54: #{vq_diffusion_forward.1} parent=5 // pred_check_branch
      %781 = sbr.rel (%p779) target = $region56
    $region55: #{vq_diffusion_forward.1} parent=5 // pred_region
      %s782 = ssub.s32 %s30, 2
      // Predicated region
      $region57: #{vq_diffusion_forward.1} parent=55 // pred_check
        %p783 = pneg %p216
      $region58: #{vq_diffusion_forward.1} parent=55 // pred_check_branch
        %785 = sbr.rel (%p783) target = $region60
      $region59: #{vq_diffusion_forward.1} parent=55 // pred_region
        %p786 = scmp.lt.s32.totalorder %s36, 1
        %s787 = scalar_select %p786, %s36, 1
        %s788 = smul.addr %s787, 8
        %s789 = scalar_lea.vmem %s10, %s788
      $region60: #{vq_diffusion_forward.1} parent=55 // pred_fallthru
        _
    $region56: #{vq_diffusion_forward.1} parent=5 // pred_fallthru
      _
  $region6: #{vq_diffusion_forward.1} parent=0 // loop_footer
    %s34 = sadd.s32 1, %s30
  $region7: #{vq_diffusion_forward.1} parent=0 // loop_footer_branch
    %29 = sbr.rel target = $region3
  $region8: #{vq_diffusion_forward.1} parent=0 // loop_exit
    _

</llo_original>
